<compile_context>
chip_gen: v7x
topology: tpu7x:2x2x1
jax: 0.10.0
libtpu: 0.0.40
codegen_flags: <defaults>
</compile_context>

<pallas_src>
import functools

import jax
import jax.numpy as jnp
import numpy as np
from jax import lax
from jax.experimental import pallas as pl
from jax.experimental.pallas import tpu as pltpu

_BIG = 1e18  # finite sentinel: (-BIG) - (+BIG) stays finite in f32, relu -> 0


def _ranking_loss_kernel(nb, n_strips, strips_per_iter,
                         r_pos_t_ref, r_neg_ref, o_ref):
    """One (p, n) grid point.

    r_pos_t_ref : [TP, B]  positives (margin pre-subtracted), class-major,
                           +BIG sentinels.
    r_neg_ref   : [B, TN]  negatives, batch-major, -BIG sentinels.
    o_ref       : [8, TN]  this block's partial sums (written once at the end).

    Computes  o[s, n] = sum_b sum_{strips t} relu(r_neg[b, n] - r_pos[t*8+s, b])
    folded over the TP positives in 8-sublane strips.
    """
    tn = o_ref.shape[1]

    def strip_body(s, acc):
        base0 = pl.multiple_of(s * (8 * strips_per_iter), 8)
        for b in range(nb):                       # static unroll over batch
            # One [1,TN] ref read + one explicit sublane broadcast per batch
            # row, hoisted out of the strip sweep (broadcast_in_dim is not
            # CSE'd by JAX).
            rn_b8 = jnp.broadcast_to(r_neg_ref[b:b + 1, :], (8, tn))
            for u in range(strips_per_iter):      # manual unroll over strips
                start = pl.multiple_of(base0 + 8 * u, 8)
                rp_col = r_pos_t_ref[pl.ds(start, 8), b:b + 1]      # [8, 1]
                # 3 VALU vreg-ops per TN/128 lanes: sub, max, accumulate.
                acc = acc + jnp.maximum(rn_b8 - rp_col, 0.0)        # [8, TN]
        return acc

    acc0 = jnp.zeros((8, tn), jnp.float32)
    acc = lax.fori_loop(0, n_strips // strips_per_iter, strip_body, acc0)
    o_ref[...] = acc                              # single lane-dense store


def _round_up(x, m):
    return ((x + m - 1) // m) * m


def _pick_tile(cl_pad, cap):
    """Largest multiple of 128 that divides cl_pad and is <= cap."""
    best = 128
    d = 128
    while d <= min(cap, cl_pad):
        if cl_pad % d == 0:
            best = d
        d += 128
    return best


def ranking_loss(ranks, labels, class_ids_loaded, neg_penalty):
    """Returns a shape-(1,) f32 loss, matching the torch.zeros(1) accumulator."""
    # --- wrapper glue: gather loaded classes, fold label masks + margin into
    # +/-BIG sentinel rank vectors, pad the class axis to a tile multiple. ----
    ranks_l = ranks[:, class_ids_loaded].astype(jnp.float32)
    labels_l = labels[:, class_ids_loaded].astype(jnp.float32)
    B, CL = ranks_l.shape

    pos_mask = labels_l == 1.0
    neg_mask = (1.0 - labels_l) == 1.0            # matches torch's `neg_labels == 1`

    # relu(m + rn - rp) == relu(rn - (rp - m)):  fold the margin into the
    # positives so the kernel does no per-element margin add.
    r_pos = jnp.where(pos_mask, ranks_l - jnp.float32(neg_penalty), _BIG)   # [B, CL]
    r_neg = jnp.where(neg_mask, ranks_l, -_BIG)                             # [B, CL]

    cl_pad = _round_up(CL, 128)                   # minimal class padding
    tn = _pick_tile(cl_pad, 1024)                 # big lane tile (negatives)
    tp = _pick_tile(cl_pad, 256)                  # sublane tile (positives)

    r_pos_p = jnp.full((B, cl_pad), _BIG, jnp.float32).at[:, :CL].set(r_pos)
    r_neg_p = jnp.full((B, cl_pad), -_BIG, jnp.float32).at[:, :CL].set(r_neg)
    r_pos_t = r_pos_p.T                           # [cl_pad, B], class-major

    num_p = cl_pad // tp
    num_n = cl_pad // tn
    n_strips = tp // 8

    # Keep traced body size ~ B * strips_per_iter; larger batches get less
    # manual unroll.
    strips_per_iter = 4 if B <= 8 else (2 if B <= 32 else 1)
    while n_strips % strips_per_iter:
        strips_per_iter //= 2

    kernel = functools.partial(_ranking_loss_kernel, B, n_strips, strips_per_iter)

    flops = int(3 * B * cl_pad * cl_pad)
    bytes_accessed = int((2 * B * cl_pad + num_p * 8 * cl_pad) * 4)

    out = pl.pallas_call(
        kernel,
        out_shape=jax.ShapeDtypeStruct((num_p * 8, num_n * tn), jnp.float32),
        grid=(num_p, num_n),
        in_specs=[
            pl.BlockSpec((tp, B), lambda p, n: (p, 0)),   # r_pos_t: p tiles
            pl.BlockSpec((B, tn), lambda p, n: (0, n)),   # r_neg:   n tiles
        ],
        # Each (p, n) grid point owns its own lane-dense output block -> both
        # grid axes can be "parallel" (v7x megacore balance), no scratch.
        out_specs=pl.BlockSpec((8, tn), lambda p, n: (p, n)),
        compiler_params=pltpu.CompilerParams(
            dimension_semantics=("parallel", "parallel")),
        cost_estimate=pl.CostEstimate(
            flops=flops, transcendentals=0, bytes_accessed=bytes_accessed),
    )(r_pos_t, r_neg_p)

    # Tiny epilogue: cross-block sum of partials + 1/B scale.
    loss = jnp.sum(out) * (1.0 / B)
    return loss.reshape((1,))


def _ranking_loss_ref(ranks, labels, class_ids_loaded, neg_penalty):
    """Pure-JAX reference mirroring the PyTorch loop."""
    lab = labels[:, class_ids_loaded].astype(jnp.float32)
    r = ranks[:, class_ids_loaded].astype(jnp.float32)
    B = lab.shape[0]
    total = 0.0
    for i in range(B):
        pos = (lab[i] == 1.0).astype(jnp.float32)
        neg = ((1.0 - lab[i]) == 1.0).astype(jnp.float32)
        pen = neg_penalty + r[i][None, :] - r[i][:, None]   # [p, n]
        pen = jnp.maximum(pen, 0.0) * (pos[:, None] * neg[None, :])
        total = total + jnp.sum(pen)
    return (total / B).reshape((1,))


if __name__ == "__main__":
    key = jax.random.PRNGKey(0)
    B, C = 2, 16
    k1, k2 = jax.random.split(key)

    ranks = jax.random.normal(k1, (B, C), dtype=jnp.float32)
    labels = (jax.random.uniform(k2, (B, C)) > 0.5).astype(jnp.float32)
    class_ids_loaded = jnp.array([0, 2, 3, 5, 7, 8, 11, 13], dtype=jnp.int32)
    neg_penalty = 0.5  # module __init__ hyperparameter (deterministic, in-script)

    loss = ranking_loss(ranks, labels, class_ids_loaded, neg_penalty)
    jax.block_until_ready(loss)

    ref = _ranking_loss_ref(ranks, labels, class_ids_loaded, neg_penalty)
    np.testing.assert_allclose(np.asarray(loss), np.asarray(ref), rtol=1e-5, atol=1e-5)

    print("KERNEL_OK")
</pallas_src>

<mosaic_0001>
module attributes {stable_mosaic.version = 11 : i64} {
  func.func @_ranking_loss_kernel(%arg0: i32, %arg1: i32, %arg2: memref<128x2xf32, #tpu.memory_space<vmem>>, %arg3: memref<2x128xf32, #tpu.memory_space<vmem>>, %arg4: memref<8x128xf32, #tpu.memory_space<vmem>>) attributes {dimension_semantics = [#tpu.dimension_semantics<parallel>, #tpu.dimension_semantics<parallel>], iteration_bounds = array<i64: 1, 1>, scalar_prefetch = 0 : i64, scratch_operands = 0 : i64, tpu.core_type = #tpu.core_type<tc>, window_params = [{transform_indices = @transform_0, window_bounds = array<i64: 128, 2>}, {transform_indices = @transform_1, window_bounds = array<i64: 2, 128>}, {transform_indices = @transform_2, window_bounds = array<i64: 8, 128>}]} {
    %cst = arith.constant 0.000000e+00 : f32
    %0 = vector.broadcast %cst : f32 to vector<8x128xf32>
    %c0_i32 = arith.constant 0 : i32
    %c4_i32 = arith.constant 4 : i32
    %1 = arith.addi %c0_i32, %c4_i32 : i32
    %c1_i32 = arith.constant 1 : i32
    %2 = scf.for %arg5 = %c0_i32 to %1 step %c1_i32 iter_args(%arg6 = %0) -> (vector<8x128xf32>)  : i32 {
      %c32_i32 = arith.constant 32 : i32
      %4 = arith.muli %arg5, %c32_i32 : i32
      %5 = tpu.assume_multiple %4, 8 : i32
      %c0_2 = arith.constant 0 : index
      %c0_3 = arith.constant 0 : index
      %6 = vector.load %arg3[%c0_2, %c0_3] : memref<2x128xf32, #tpu.memory_space<vmem>>, vector<1x128xf32>
      %7 = vector.shape_cast %6 : vector<1x128xf32> to vector<1x128xf32>
      %8 = vector.broadcast %7 : vector<1x128xf32> to vector<8x128xf32>
      %c0_i32_4 = arith.constant 0 : i32
      %9 = arith.addi %5, %c0_i32_4 : i32
      %10 = tpu.assume_multiple %9, 8 : i32
      %11 = arith.index_cast %10 : i32 to index
      %c0_5 = arith.constant 0 : index
      %12 = vector.load %arg2[%11, %c0_5] : memref<128x2xf32, #tpu.memory_space<vmem>>, vector<8x1xf32>
      %13 = vector.broadcast %12 : vector<8x1xf32> to vector<8x128xf32>
      %14 = arith.subf %8, %13 : vector<8x128xf32>
      %cst_6 = arith.constant 0.000000e+00 : f32
      %15 = vector.broadcast %cst_6 : f32 to vector<8x128xf32>
      %16 = arith.maximumf %14, %15 : vector<8x128xf32>
      %17 = arith.addf %arg6, %16 : vector<8x128xf32>
      %c8_i32 = arith.constant 8 : i32
      %18 = arith.addi %5, %c8_i32 : i32
      %19 = tpu.assume_multiple %18, 8 : i32
      %20 = arith.index_cast %19 : i32 to index
      %c0_7 = arith.constant 0 : index
      %21 = vector.load %arg2[%20, %c0_7] : memref<128x2xf32, #tpu.memory_space<vmem>>, vector<8x1xf32>
      %22 = vector.broadcast %21 : vector<8x1xf32> to vector<8x128xf32>
      %23 = arith.subf %8, %22 : vector<8x128xf32>
      %cst_8 = arith.constant 0.000000e+00 : f32
      %24 = vector.broadcast %cst_8 : f32 to vector<8x128xf32>
      %25 = arith.maximumf %23, %24 : vector<8x128xf32>
      %26 = arith.addf %17, %25 : vector<8x128xf32>
      %c16_i32 = arith.constant 16 : i32
      %27 = arith.addi %5, %c16_i32 : i32
      %28 = tpu.assume_multiple %27, 8 : i32
      %29 = arith.index_cast %28 : i32 to index
      %c0_9 = arith.constant 0 : index
      %30 = vector.load %arg2[%29, %c0_9] : memref<128x2xf32, #tpu.memory_space<vmem>>, vector<8x1xf32>
      %31 = vector.broadcast %30 : vector<8x1xf32> to vector<8x128xf32>
      %32 = arith.subf %8, %31 : vector<8x128xf32>
      %cst_10 = arith.constant 0.000000e+00 : f32
      %33 = vector.broadcast %cst_10 : f32 to vector<8x128xf32>
      %34 = arith.maximumf %32, %33 : vector<8x128xf32>
      %35 = arith.addf %26, %34 : vector<8x128xf32>
      %c24_i32 = arith.constant 24 : i32
      %36 = arith.addi %5, %c24_i32 : i32
      %37 = tpu.assume_multiple %36, 8 : i32
      %38 = arith.index_cast %37 : i32 to index
      %c0_11 = arith.constant 0 : index
      %39 = vector.load %arg2[%38, %c0_11] : memref<128x2xf32, #tpu.memory_space<vmem>>, vector<8x1xf32>
      %40 = vector.broadcast %39 : vector<8x1xf32> to vector<8x128xf32>
      %41 = arith.subf %8, %40 : vector<8x128xf32>
      %cst_12 = arith.constant 0.000000e+00 : f32
      %42 = vector.broadcast %cst_12 : f32 to vector<8x128xf32>
      %43 = arith.maximumf %41, %42 : vector<8x128xf32>
      %44 = arith.addf %35, %43 : vector<8x128xf32>
      %c1 = arith.constant 1 : index
      %c0_13 = arith.constant 0 : index
      %45 = vector.load %arg3[%c1, %c0_13] : memref<2x128xf32, #tpu.memory_space<vmem>>, vector<1x128xf32>
      %46 = vector.shape_cast %45 : vector<1x128xf32> to vector<1x128xf32>
      %47 = vector.broadcast %46 : vector<1x128xf32> to vector<8x128xf32>
      %c0_i32_14 = arith.constant 0 : i32
      %48 = arith.addi %5, %c0_i32_14 : i32
      %49 = tpu.assume_multiple %48, 8 : i32
      %50 = arith.index_cast %49 : i32 to index
      %c1_15 = arith.constant 1 : index
      %51 = vector.load %arg2[%50, %c1_15] : memref<128x2xf32, #tpu.memory_space<vmem>>, vector<8x1xf32>
      %52 = vector.broadcast %51 : vector<8x1xf32> to vector<8x128xf32>
      %53 = arith.subf %47, %52 : vector<8x128xf32>
      %cst_16 = arith.constant 0.000000e+00 : f32
      %54 = vector.broadcast %cst_16 : f32 to vector<8x128xf32>
      %55 = arith.maximumf %53, %54 : vector<8x128xf32>
      %56 = arith.addf %44, %55 : vector<8x128xf32>
      %c8_i32_17 = arith.constant 8 : i32
      %57 = arith.addi %5, %c8_i32_17 : i32
      %58 = tpu.assume_multiple %57, 8 : i32
      %59 = arith.index_cast %58 : i32 to index
      %c1_18 = arith.constant 1 : index
      %60 = vector.load %arg2[%59, %c1_18] : memref<128x2xf32, #tpu.memory_space<vmem>>, vector<8x1xf32>
      %61 = vector.broadcast %60 : vector<8x1xf32> to vector<8x128xf32>
      %62 = arith.subf %47, %61 : vector<8x128xf32>
      %cst_19 = arith.constant 0.000000e+00 : f32
      %63 = vector.broadcast %cst_19 : f32 to vector<8x128xf32>
      %64 = arith.maximumf %62, %63 : vector<8x128xf32>
      %65 = arith.addf %56, %64 : vector<8x128xf32>
      %c16_i32_20 = arith.constant 16 : i32
      %66 = arith.addi %5, %c16_i32_20 : i32
      %67 = tpu.assume_multiple %66, 8 : i32
      %68 = arith.index_cast %67 : i32 to index
      %c1_21 = arith.constant 1 : index
      %69 = vector.load %arg2[%68, %c1_21] : memref<128x2xf32, #tpu.memory_space<vmem>>, vector<8x1xf32>
      %70 = vector.broadcast %69 : vector<8x1xf32> to vector<8x128xf32>
      %71 = arith.subf %47, %70 : vector<8x128xf32>
      %cst_22 = arith.constant 0.000000e+00 : f32
      %72 = vector.broadcast %cst_22 : f32 to vector<8x128xf32>
      %73 = arith.maximumf %71, %72 : vector<8x128xf32>
      %74 = arith.addf %65, %73 : vector<8x128xf32>
      %c24_i32_23 = arith.constant 24 : i32
      %75 = arith.addi %5, %c24_i32_23 : i32
      %76 = tpu.assume_multiple %75, 8 : i32
      %77 = arith.index_cast %76 : i32 to index
      %c1_24 = arith.constant 1 : index
      %78 = vector.load %arg2[%77, %c1_24] : memref<128x2xf32, #tpu.memory_space<vmem>>, vector<8x1xf32>
      %79 = vector.broadcast %78 : vector<8x1xf32> to vector<8x128xf32>
      %80 = arith.subf %47, %79 : vector<8x128xf32>
      %cst_25 = arith.constant 0.000000e+00 : f32
      %81 = vector.broadcast %cst_25 : f32 to vector<8x128xf32>
      %82 = arith.maximumf %80, %81 : vector<8x128xf32>
      %83 = arith.addf %74, %82 : vector<8x128xf32>
      scf.yield %83 : vector<8x128xf32>
    }
    %c4_i32_0 = arith.constant 4 : i32
    %c0 = arith.constant 0 : index
    %c0_1 = arith.constant 0 : index
    %3 = vector.load %arg4[%c0, %c0_1] : memref<8x128xf32, #tpu.memory_space<vmem>>, vector<8x128xf32>
    tpu.vector_store %arg4[%c0, %c0_1], %2 {strides = array<i32>} : memref<8x128xf32, #tpu.memory_space<vmem>>, vector<8x128xf32>,
    return
  }
  func.func @transform_0(%arg0: i32, %arg1: i32) -> (i32, i32) {
    %c0_i32 = arith.constant 0 : i32
    %c0_i32_0 = arith.constant 0 : i32
    return %arg0, %c0_i32 : i32, i32
  }
  func.func @transform_1(%arg0: i32, %arg1: i32) -> (i32, i32) {
    %c0_i32 = arith.constant 0 : i32
    %c0_i32_0 = arith.constant 0 : i32
    return %c0_i32, %arg1 : i32, i32
  }
  func.func @transform_2(%arg0: i32, %arg1: i32) -> (i32, i32) {
    %c0_i32 = arith.constant 0 : i32
    return %arg0, %arg1 : i32, i32
  }
}

</mosaic_0001>

<llo_original>
// kernel: tpu_custom_call.1
$region0: #{tpu_custom_call.1}
  #allocation0 [shape = 'u32[]', space=smem, size = 0x4, offset = 0x4, fixed_abs, tag = 'smem constant byte address 0x4 - core index']
  #allocation1 [shape = 'u32[144,128]{1,0:T(1,128)}', space=vmem, size = 0x12000, scoped, tag = 'internal scratch']
  %s0 = inlined_call_operand.vmem [shape: f32[128,2], index: 0, kind: input, shape index: {}]
  %s1 = inlined_call_operand.vmem [shape: f32[2,128], index: 1, kind: input, shape index: {}]
  %s2 = inlined_call_operand.hbm [shape: f32[8,128], index: 2, kind: output, shape index: {}]
  %s3 = sld [smem:[#allocation0]]
  $region25: #{tpu_custom_call.1} parent=0
    _
  %s5 = ssub.s32 1, %s3
  %s6 = scalar_select 0, %s5, %s3
  $region1: #{tpu_custom_call.1} parent=0
    #allocation2 [shape = 'u8[4096]{0}', space=vmem, size = 0x1000, scoped, tag = 'output window, operand 0, single buffered']
    #allocation3 [shape = 's32[1]{0}', space=sflag, size = 0x4, scoped, tag = 'scoped memory for tpu_custom_call.1']
    %7 = vsyncpa [#allocation3], 0
    // Predicated region
    $region2: #{tpu_custom_call.1} parent=1 // pred_check
      _
    $region3: #{tpu_custom_call.1} parent=1 // pred_check_branch
      %9 = sbr.rel (0) target = $region5
    $region4: #{tpu_custom_call.1} parent=1 // pred_region
      _
    $region5: #{tpu_custom_call.1} parent=1 // pred_fallthru
      _
    // Predicated region
    $region6: #{tpu_custom_call.1} parent=1 // pred_check
      _
    $region7: #{tpu_custom_call.1} parent=1 // pred_check_branch
      %11 = sbr.rel (0) target = $region9
    $region8: #{tpu_custom_call.1} parent=1 // pred_region
      _
    $region9: #{tpu_custom_call.1} parent=1 // pred_fallthru
      _
    loop: start=0, step=1, limit=4
    $region10: #{tpu_custom_call.1} parent=1 // loop_pre_header
      _
    $region11: #{tpu_custom_call.1} parent=1 // loop_header
      %s13 = sphi 0, %s17
      %p14 = scmp.ge.s32.totalorder %s13, 4
      %v18 = vphi 0.0, %v100
    $region12: #{tpu_custom_call.1} parent=1 // loop_header_branch
      %16 = sbr.rel (%p14) target = $region16
    $region13: #{tpu_custom_call.1} parent=1 // loop_body
      %s19 = smul.u32 %s13, 32
      %v20 = vld [vmem:[%s1] sm:$0x1]
      %v21 = vlaneseq
      %v22 = vshrl.u32 %v21, 7
      %v23 = vsub.s32 0, %v22
      %v24 = vrot.slane %v20, %v23
      %s25 = scalar_lea.vmem %s0, %s19
      %v26 = vld [vmem:[%s25] sm:$0xff]
      %28 = vset.pattern.permute.xlu0 0
      %29 = vperm.xlu0 %28, %v26
      %v30 = vpop.permute.xlu0 %29
      %v32 = vsub.f32 %v24, %v30
      %v33 = vmax.f32 %v32, 0.0
      %v34 = vadd.f32 %v18, %v33
      %s35 = sadd.s32 %s19, 8
      %s36 = scalar_lea.vmem %s0, %s35
      %v37 = vld [vmem:[%s36] sm:$0xff]
      %39 = vset.pattern.permute.xlu0 0
      %40 = vperm.xlu0 %39, %v37
      %v41 = vpop.permute.xlu0 %40
      %v43 = vsub.f32 %v24, %v41
      %v44 = vmax.f32 %v43, 0.0
      %v45 = vadd.f32 %v34, %v44
      %s46 = sadd.s32 %s19, 16
      %s47 = scalar_lea.vmem %s0, %s46
      %v48 = vld [vmem:[%s47] sm:$0xff]
      %50 = vset.pattern.permute.xlu0 0
      %51 = vperm.xlu0 %50, %v48
      %v52 = vpop.permute.xlu0 %51
      %v54 = vsub.f32 %v24, %v52
      %v55 = vmax.f32 %v54, 0.0
      %v56 = vadd.f32 %v45, %v55
      %s57 = sadd.s32 %s19, 24
      %s58 = scalar_lea.vmem %s0, %s57
      %v59 = vld [vmem:[%s58] sm:$0xff]
      %61 = vset.pattern.permute.xlu0 0
      %62 = vperm.xlu0 %61, %v59
      %v63 = vpop.permute.xlu0 %62
      %v65 = vsub.f32 %v24, %v63
      %v66 = vmax.f32 %v65, 0.0
      %v67 = vadd.f32 %v56, %v66
      %v68 = vld [vmem:[%s1 + $0x1] sm:$0x1]
      %v69 = vlaneseq
      %v70 = vshrl.u32 %v69, 7
      %v71 = vsub.s32 0, %v70
      %v72 = vrot.slane %v68, %v71
      %73 = vset.pattern.permute.xlu0 1
      %74 = vperm.xlu0 %73, %v26
      %v75 = vpop.permute.xlu0 %74
      %v77 = vsub.f32 %v72, %v75
      %v78 = vmax.f32 %v77, 0.0
      %v79 = vadd.f32 %v67, %v78
      %80 = vset.pattern.permute.xlu0 1
      %81 = vperm.xlu0 %80, %v37
      %v82 = vpop.permute.xlu0 %81
      %v84 = vsub.f32 %v72, %v82
      %v85 = vmax.f32 %v84, 0.0
      %v86 = vadd.f32 %v79, %v85
      %87 = vset.pattern.permute.xlu0 1
      %88 = vperm.xlu0 %87, %v48
      %v89 = vpop.permute.xlu0 %88
      %v91 = vsub.f32 %v72, %v89
      %v92 = vmax.f32 %v91, 0.0
      %v93 = vadd.f32 %v86, %v92
      %94 = vset.pattern.permute.xlu0 1
      %95 = vperm.xlu0 %94, %v59
      %v96 = vpop.permute.xlu0 %95
      %v98 = vsub.f32 %v72, %v96
      %v99 = vmax.f32 %v98, 0.0
      %v100 = vadd.f32 %v93, %v99
    $region14: #{tpu_custom_call.1} parent=1 // loop_footer
      %s17 = sadd.s32 1, %s13
    $region15: #{tpu_custom_call.1} parent=1 // loop_footer_branch
      %12 = sbr.rel target = $region11
    $region16: #{tpu_custom_call.1} parent=1 // loop_exit
      _
    %101 = vst [vmem:[#allocation2] sm:$0xff] %v18
    // Predicated region
    $region17: #{tpu_custom_call.1} parent=1 // pred_check
      _
    $region18: #{tpu_custom_call.1} parent=1 // pred_check_branch
      %103 = sbr.rel (0) target = $region20
    $region19: #{tpu_custom_call.1} parent=1 // pred_region
      %s105 = ssub.s32 128, 128
      %106 = vsyncadd [#allocation3], %s105
      %s108 = sshll.u32 [#allocation2], 4
      %s109 = int_to_ptr.vmem [resolvable:$true] %s108
      %111 = dma.vmem_to_hbm [thread:$0]  %s109, 128, %s2, [#allocation3]
    $region20: #{tpu_custom_call.1} parent=1 // pred_fallthru
      _
    // Predicated region
    $region21: #{tpu_custom_call.1} parent=1 // pred_check
      _
    $region22: #{tpu_custom_call.1} parent=1 // pred_check_branch
      %113 = sbr.rel (0) target = $region24
    $region23: #{tpu_custom_call.1} parent=1 // pred_region
      %114 = dma.done [#allocation3], 128
    $region24: #{tpu_custom_call.1} parent=1 // pred_fallthru
      _
    %115 = vsyncpa [#allocation3], 1

</llo_original>
